<compile_context>
chip_gen: v5e
topology: v5e:2x2
jax: 0.10.0
libtpu: 0.0.40
codegen_flags: <defaults>
</compile_context>

<pallas_src>
import functools

import numpy as np

import jax
import jax.numpy as jnp
from jax.experimental import pallas as pl
from jax.experimental.pallas import tpu as pltpu


def _self_attention_local_kernel(
    x_ref,        # (1, C, N)   input block for this batch element (PyTorch layout)
    w_ref,        # (C, Cp)     fused [wq^T | wk^T | gamma*wv^T]
    b_ref,        # (1, Cp)     fused [bq | bk | gamma*bv]
    inv_cnt_ref,  # (N, 1)      1 / max(count_overlap, 1), precomputed (static)
    o_ref,        # (1, C, Np)  pooled output block
    proj_ref,     # VMEM (N, Cp)  fused Q|K|V projections
    acc_ref,      # VMEM (N, C) f32 : sum over windows of gamma * out_local
    *,
    window_size: int,
    stride: int,
    pool: int,
    group_size: int,
    num_windows: int,
):
    _, C, N = x_ref.shape
    W = window_size
    G = group_size
    Cp = w_ref.shape[1]
    C8 = (Cp - C) // 2
    span = (G - 1) * stride + W
    num_groups = num_windows // G
    dn = (((1,), (0,)), ((), ()))          # standard (M,K) x (K,N) contraction

    # ---- Fused projection: one tall MXU matmul over the full sequence.
    # x block is (C, N); contracting axis 0 of both operands yields (N, Cp)
    # channel-last without an explicit HBM transpose.
    x_cn = x_ref[0]
    proj = jax.lax.dot_general(
        x_cn, w_ref[...], (((0,), (0,)), ((), ())),
        preferred_element_type=jnp.float32) + b_ref[...]
    proj_ref[...] = proj.astype(proj_ref.dtype)

    acc_ref[...] = jnp.zeros_like(acc_ref)

    # ---- Window loop, G windows per group.  The carry holds the partial sums
    # for the W positions of the current window; each window finalizes (stores)
    # its first `stride` rows, so acc_ref is never read inside the loop.
    def _group(grp, carry):
        i0 = pl.multiple_of(grp * (G * stride), G * stride)
        blk = proj_ref[pl.ds(i0, span), :]                     # (span, Cp)
        q_span = blk[:, :C8].astype(jnp.bfloat16)              # (span, C8)
        k_span = blk[:, C8:2 * C8].astype(jnp.bfloat16)        # (span, C8)
        v_span = blk[:, 2 * C8:].astype(jnp.bfloat16)          # (span, C) = gamma*V
        # One batched energy matmul for the whole group of windows.
        s_grp = jax.lax.dot_general(                           # (span, span) f32
            q_span, k_span, (((1,), (1,)), ((), ())),
            preferred_element_type=jnp.float32)

        for g in range(G):                                     # static unroll
            off = g * stride
            e = s_grp[off:off + W, off:off + W]                # (W, W) f32
            m = jnp.max(e, axis=-1, keepdims=True)
            p = jnp.exp(e - m)
            attn = p * pl.reciprocal(
                jnp.sum(p, axis=-1, keepdims=True), approx=True)
            out_local = jax.lax.dot_general(                   # (W, C) f32
                attn.astype(jnp.bfloat16), v_span[off:off + W, :], dn,
                preferred_element_type=jnp.float32)
            carry = carry + out_local
            pos = pl.multiple_of(i0 + off, stride)
            if stride < W:
                acc_ref[pl.ds(pos, stride), :] = carry[:stride]
                carry = jnp.concatenate(
                    [carry[stride:], jnp.zeros((stride, C), jnp.float32)],
                    axis=0)
            else:
                acc_ref[pl.ds(pos, W), :] = carry
                carry = jnp.zeros_like(carry)
        return carry

    carry0 = jnp.zeros((W, C), jnp.float32)
    if num_groups > 0:
        carry = jax.lax.fori_loop(0, num_groups, _group, carry0)
    else:
        carry = carry0

    # Flush the not-yet-finalized tail rows of the last window.
    if stride < W and num_windows > 0:
        tail = W - stride
        start = num_windows * stride                           # static int
        acc_ref[start:start + tail, :] = carry[:tail]

    # ---- Overlap-average + residual.  The per-window "+ x_local" sums to
    # cnt * x, so after the precomputed reciprocal it reduces to "+ x".
    x_t = jnp.transpose(x_ref[0]).astype(jnp.float32)          # (N, C), in-VMEM
    acc_ref[...] = acc_ref[...] * inv_cnt_ref[...] + x_t

    # ---- MaxPool1d(pool) along positions via strided sublane reads.
    Np = N // pool
    pooled = acc_ref[pl.ds(0, Np, stride=pool), :]
    for off in range(1, pool):
        pooled = jnp.maximum(pooled, acc_ref[pl.ds(off, Np, stride=pool), :])
    o_ref[0] = jnp.transpose(pooled).astype(o_ref.dtype)       # (C, Np)


def self_attention_local(x_bcn, params, *, window_size, stride, pooling_factor):
    """x_bcn: (B, C, N) (PyTorch layout).  Returns (B, C, N // pooling_factor)."""
    B, C, N = x_bcn.shape
    assert C % 8 == 0 and C >= 8, "in_dim must be a multiple of 8 (in_dim//8 heads)"
    C8 = C // 8
    W = window_size
    pool = pooling_factor
    Np = N // pool
    assert N >= W, "sequence must be at least one window long"
    assert Np >= 1, "sequence shorter than pooling factor"
    # Fail fast: the windowed accumulator stores rely on sublane-aligned offsets
    # for f32 (8, 128) tiles (perf feedback).
    assert stride >= 1 and stride % 8 == 0, "stride must be a multiple of 8"

    num_windows = (N - W) // stride + 1

    # Batch G consecutive windows per MXU energy matmul.  G must divide
    # num_windows (no remainder group) and keep the group span modest.
    G = 1
    for g in range(min(8, num_windows), 0, -1):
        if num_windows % g == 0 and (g - 1) * stride + W <= 1024:
            G = g
            break
    span = (G - 1) * stride + W

    # ---- Fused weights (gamma folded into the value path).
    gamma = params["gamma"].reshape(()).astype(jnp.float32)
    w_fused = jnp.concatenate(
        [jnp.transpose(params["wq"]).astype(jnp.float32),
         jnp.transpose(params["wk"]).astype(jnp.float32),
         gamma * jnp.transpose(params["wv"]).astype(jnp.float32)], axis=1)
    b_fused = jnp.concatenate(
        [params["bq"].astype(jnp.float32),
         params["bk"].astype(jnp.float32),
         gamma * params["bv"].astype(jnp.float32)]).reshape(1, -1)
    Cp = 2 * C8 + C

    # Static overlap counts -> reciprocal.  Uncovered positions get 1 (the
    # PyTorch code would produce 0/0 = NaN there).
    cnt = np.zeros((N,), np.float32)
    for i in range(0, N - W + 1, stride):
        cnt[i:i + W] += 1.0
    inv_cnt = jnp.asarray(1.0 / np.maximum(cnt, 1.0), jnp.float32).reshape(N, 1)

    # Q/K/V scratch dtype: bf16 halves VMEM, used when group starts are
    # guaranteed 16-row aligned (bf16 sublane packing); otherwise keep f32 and
    # cast to bf16 only at the MXU operands.
    proj_dtype = jnp.bfloat16 if (G * stride) % 16 == 0 else jnp.float32

    # ---- Explicit VMEM budget from the real footprint (perf feedback).
    itemsize = jnp.dtype(x_bcn.dtype).itemsize
    scratch_bytes = (N * Cp * jnp.dtype(proj_dtype).itemsize + N * C * 4)
    io_bytes = 2 * C * N * itemsize + 2 * C * Np * itemsize          # dbl-buffered
    w_bytes = 2 * (C * Cp + Cp + N) * 4
    tmp_bytes = span * span * 4 + 2 * span * Cp * 4 + 4 * W * C * 4  # loop temps
    need = scratch_bytes + io_bytes + w_bytes + tmp_bytes
    vmem_limit = int(min(100 * 2**20,
                         max(32 * 2**20, int(1.5 * need) + (2 << 20))))

    kernel = functools.partial(
        _self_attention_local_kernel,
        window_size=W, stride=stride, pool=pool,
        group_size=G, num_windows=num_windows)

    out = pl.pallas_call(
        kernel,
        out_shape=jax.ShapeDtypeStruct((B, C, Np), x_bcn.dtype),
        grid_spec=pltpu.PrefetchScalarGridSpec(
            num_scalar_prefetch=0,
            grid=(B,),
            in_specs=[
                pl.BlockSpec((1, C, N), lambda b: (b, 0, 0)),   # x (B,C,N)
                pl.BlockSpec((C, Cp), lambda b: (0, 0)),        # fused weights
                pl.BlockSpec((1, Cp), lambda b: (0, 0)),        # fused bias
                pl.BlockSpec((N, 1), lambda b: (0, 0)),         # inv_cnt
            ],
            out_specs=pl.BlockSpec((1, C, Np), lambda b: (b, 0, 0)),
            scratch_shapes=[
                pltpu.VMEM((N, Cp), proj_dtype),    # fused Q|K|gamma*V
                pltpu.VMEM((N, C), jnp.float32),    # accumulator
            ],
        ),
        compiler_params=pltpu.CompilerParams(
            dimension_semantics=("parallel",),
            vmem_limit_bytes=vmem_limit),
    )(x_bcn, w_fused, b_fused, inv_cnt)
    return out


def _reference(x, params, *, window_size, stride, pooling_factor):
    """Pure-JAX re-implementation of SelfAttentionLocal.forward for checking."""
    B, C, N = x.shape
    wq, bq = params["wq"], params["bq"]
    wk, bk = params["wk"], params["bk"]
    wv, bv = params["wv"], params["bv"]
    gamma = params["gamma"][0]
    hp = jax.lax.Precision.HIGHEST

    out = jnp.zeros_like(x)
    cnt = jnp.zeros_like(x)
    for i in range(0, N - window_size + 1, stride):
        xl = x[:, :, i:i + window_size]                                        # (B,C,W)
        q = jnp.einsum('oc,bcn->bon', wq, xl, precision=hp) + bq[None, :, None]
        k = jnp.einsum('oc,bcn->bon', wk, xl, precision=hp) + bk[None, :, None]
        energy = jnp.einsum('bcn,bcm->bnm', q, k, precision=hp)                # (B,W,W)
        attn = jax.nn.softmax(energy, axis=-1)
        v = jnp.einsum('oc,bcn->bon', wv, xl, precision=hp) + bv[None, :, None]
        out_local = jnp.einsum('bcm,bnm->bcn', v, attn, precision=hp)
        out = out.at[:, :, i:i + window_size].add(gamma * out_local + xl)
        cnt = cnt.at[:, :, i:i + window_size].add(1.0)
    out = out / cnt
    Np = N // pooling_factor
    out = out[:, :, :Np * pooling_factor].reshape(B, C, Np, pooling_factor)
    return out.max(axis=-1)


if __name__ == "__main__":
    # Small config consistent with the module; stride is a multiple of 8 so the
    # window accumulator stores stay sublane-tile aligned.
    B, C, N = 2, 32, 32
    window_size, stride, pooling_factor = 16, 8, 2
    C8 = C // 8

    key = jax.random.PRNGKey(0)
    ks = jax.random.split(key, 8)
    x = jax.random.normal(ks[0], (B, C, N), jnp.float32)

    # Conv1d(kernel_size=1) weight is (Cout, Cin).  gamma is zero-init in the
    # module; use a nonzero value so the attention path contributes.
    params = {
        "wq": 0.1 * jax.random.normal(ks[1], (C8, C), jnp.float32),
        "bq": 0.1 * jax.random.normal(ks[2], (C8,), jnp.float32),
        "wk": 0.1 * jax.random.normal(ks[3], (C8, C), jnp.float32),
        "bk": 0.1 * jax.random.normal(ks[4], (C8,), jnp.float32),
        "wv": 0.1 * jax.random.normal(ks[5], (C, C), jnp.float32),
        "bv": 0.1 * jax.random.normal(ks[6], (C,), jnp.float32),
        "gamma": jnp.array([0.5], jnp.float32),
    }

    out = self_attention_local(
        x, params,
        window_size=window_size, stride=stride, pooling_factor=pooling_factor)
    out = jax.block_until_ready(out)

    ref = _reference(
        x, params,
        window_size=window_size, stride=stride, pooling_factor=pooling_factor)

    assert out.shape == (B, C, N // pooling_factor), out.shape
    # Tolerance reflects the deliberate bf16 MXU operands + approx reciprocal
    # in the kernel vs. the f32 HIGHEST-precision reference.
    max_err = float(jnp.max(jnp.abs(out - ref)))
    assert jnp.allclose(out, ref, atol=2e-2, rtol=2e-2), max_err
    print("KERNEL_OK")
</pallas_src>

<mosaic_0001>
module attributes {stable_mosaic.version = 11 : i64} {
  func.func @_self_attention_local_kernel(%arg0: i32, %arg1: memref<1x32x32xf32, #tpu.memory_space<vmem>>, %arg2: memref<32x40xf32, #tpu.memory_space<vmem>>, %arg3: memref<1x40xf32, #tpu.memory_space<vmem>>, %arg4: memref<32x1xf32, #tpu.memory_space<vmem>>, %arg5: memref<1x32x16xf32, #tpu.memory_space<vmem>>, %arg6: memref<32x40xf32, #tpu.memory_space<vmem>>, %arg7: memref<32x32xf32, #tpu.memory_space<vmem>>) attributes {dimension_semantics = [#tpu.dimension_semantics<parallel>], iteration_bounds = array<i64: 2>, scalar_prefetch = 0 : i64, scratch_operands = 2 : i64, tpu.core_type = #tpu.core_type<tc>, window_params = [{transform_indices = @transform_0, window_bounds = array<i64: 1, 32, 32>}, {pipeline_mode = #tpu.pipeline_mode<synchronous>, transform_indices = @transform_1, window_bounds = array<i64: 32, 40>}, {pipeline_mode = #tpu.pipeline_mode<synchronous>, transform_indices = @transform_2, window_bounds = array<i64: 1, 40>}, {pipeline_mode = #tpu.pipeline_mode<synchronous>, transform_indices = @transform_3, window_bounds = array<i64: 32, 1>}, {transform_indices = @transform_4, window_bounds = array<i64: 1, 32, 16>}]} {
    %c0 = arith.constant 0 : index
    %c0_0 = arith.constant 0 : index
    %c0_1 = arith.constant 0 : index
    %0 = vector.load %arg1[%c0, %c0_0, %c0_1] : memref<1x32x32xf32, #tpu.memory_space<vmem>>, vector<1x32x32xf32>
    %1 = vector.shape_cast %0 : vector<1x32x32xf32> to vector<32x32xf32>
    %c0_2 = arith.constant 0 : index
    %c0_3 = arith.constant 0 : index
    %2 = vector.load %arg2[%c0_2, %c0_3] : memref<32x40xf32, #tpu.memory_space<vmem>>, vector<32x40xf32>
    %cst = arith.constant dense<0.000000e+00> : vector<32x40xf32>
    %3 = tpu.matmul %1, %2, %cst {dimension_numbers = #tpu.dot_dimension_numbers<[0], [0], [1], [1], [0, 1, 1, 1], [], []>} : vector<32x32xf32>, vector<32x40xf32>, vector<32x40xf32> -> vector<32x40xf32>
    %c0_4 = arith.constant 0 : index
    %c0_5 = arith.constant 0 : index
    %4 = vector.load %arg3[%c0_4, %c0_5] : memref<1x40xf32, #tpu.memory_space<vmem>>, vector<1x40xf32>
    %5 = vector.broadcast %4 : vector<1x40xf32> to vector<32x40xf32>
    %6 = arith.addf %3, %5 : vector<32x40xf32>
    %c0_6 = arith.constant 0 : index
    %c0_7 = arith.constant 0 : index
    %7 = vector.load %arg6[%c0_6, %c0_7] : memref<32x40xf32, #tpu.memory_space<vmem>>, vector<32x40xf32>
    tpu.vector_store %arg6[%c0_6, %c0_7], %6 {strides = array<i32>} : memref<32x40xf32, #tpu.memory_space<vmem>>, vector<32x40xf32>,
    %cst_8 = arith.constant 0.000000e+00 : f32
    %8 = vector.broadcast %cst_8 : f32 to vector<32x32xf32>
    %c0_9 = arith.constant 0 : index
    %c0_10 = arith.constant 0 : index
    %9 = vector.load %arg7[%c0_9, %c0_10] : memref<32x32xf32, #tpu.memory_space<vmem>>, vector<32x32xf32>
    tpu.vector_store %arg7[%c0_9, %c0_10], %8 {strides = array<i32>} : memref<32x32xf32, #tpu.memory_space<vmem>>, vector<32x32xf32>,
    %cst_11 = arith.constant 0.000000e+00 : f32
    %10 = vector.broadcast %cst_11 : f32 to vector<16x32xf32>
    %c0_i32 = arith.constant 0 : i32
    %c24_i32 = arith.constant 24 : i32
    %11 = arith.muli %c0_i32, %c24_i32 : i32
    %12 = tpu.assume_multiple %11, 24 : i32
    %13 = arith.index_cast %12 : i32 to index
    %c0_12 = arith.constant 0 : index
    %14 = vector.load %arg6[%13, %c0_12] : memref<32x40xf32, #tpu.memory_space<vmem>>, vector<32x40xf32>
    %15 = vector.extract_strided_slice %14 {offsets = [0, 0], sizes = [32, 4], strides = [1, 1]} : vector<32x40xf32> to vector<32x4xf32>
    %16 = arith.truncf %15 : vector<32x4xf32> to vector<32x4xbf16>
    %17 = vector.extract_strided_slice %14 {offsets = [0, 4], sizes = [32, 4], strides = [1, 1]} : vector<32x40xf32> to vector<32x4xf32>
    %18 = arith.truncf %17 : vector<32x4xf32> to vector<32x4xbf16>
    %19 = vector.extract_strided_slice %14 {offsets = [0, 8], sizes = [32, 32], strides = [1, 1]} : vector<32x40xf32> to vector<32x32xf32>
    %20 = arith.truncf %19 : vector<32x32xf32> to vector<32x32xbf16>
    %cst_13 = arith.constant dense<0.000000e+00> : vector<32x32xf32>
    %21 = tpu.matmul %16, %18, %cst_13 {dimension_numbers = #tpu.dot_dimension_numbers<[1], [1], [0], [0], [0, 0, 1, 0], [], []>} : vector<32x4xbf16>, vector<32x4xbf16>, vector<32x32xf32> -> vector<32x32xf32>
    %22 = vector.extract_strided_slice %21 {offsets = [0, 0], sizes = [16, 16], strides = [1, 1]} : vector<32x32xf32> to vector<16x16xf32>
    %cst_14 = arith.constant dense<0xFF800000> : vector<16xf32>
    %23 = vector.multi_reduction <maximumf>, %22, %cst_14 [1] : vector<16x16xf32> to vector<16xf32>
    %24 = vector.shape_cast %23 : vector<16xf32> to vector<16x1xf32>
    %25 = vector.broadcast %24 : vector<16x1xf32> to vector<16x16xf32>
    %26 = arith.subf %22, %25 : vector<16x16xf32>
    %27 = math.exp %26 : vector<16x16xf32>
    %cst_15 = arith.constant dense<0.000000e+00> : vector<16xf32>
    %28 = vector.multi_reduction <add>, %27, %cst_15 [1] : vector<16x16xf32> to vector<16xf32>
    %29 = vector.shape_cast %28 : vector<16xf32> to vector<16x1xf32>
    %30 = tpu.reciprocal %29 {approx = true} : vector<16x1xf32> -> vector<16x1xf32>
    %31 = vector.broadcast %30 : vector<16x1xf32> to vector<16x16xf32>
    %32 = arith.mulf %27, %31 : vector<16x16xf32>
    %33 = arith.truncf %32 : vector<16x16xf32> to vector<16x16xbf16>
    %34 = vector.extract_strided_slice %20 {offsets = [0, 0], sizes = [16, 32], strides = [1, 1]} : vector<32x32xbf16> to vector<16x32xbf16>
    %cst_16 = arith.constant dense<0.000000e+00> : vector<16x32xf32>
    %35 = tpu.matmul %33, %34, %cst_16 {dimension_numbers = #tpu.dot_dimension_numbers<[1], [0], [0], [1], [0, 0, 1, 1], [], []>} : vector<16x16xbf16>, vector<16x32xbf16>, vector<16x32xf32> -> vector<16x32xf32>
    %36 = arith.addf %10, %35 : vector<16x32xf32>
    %c0_i32_17 = arith.constant 0 : i32
    %37 = arith.addi %12, %c0_i32_17 : i32
    %38 = tpu.assume_multiple %37, 8 : i32
    %39 = vector.extract_strided_slice %36 {offsets = [0, 0], sizes = [8, 32], strides = [1, 1]} : vector<16x32xf32> to vector<8x32xf32>
    %40 = arith.index_cast %38 : i32 to index
    %c0_18 = arith.constant 0 : index
    %41 = vector.load %arg7[%40, %c0_18] : memref<32x32xf32, #tpu.memory_space<vmem>>, vector<8x32xf32>
    tpu.vector_store %arg7[%40, %c0_18], %39 {strides = array<i32>} : memref<32x32xf32, #tpu.memory_space<vmem>>, vector<8x32xf32>,
    %42 = vector.extract_strided_slice %36 {offsets = [8, 0], sizes = [8, 32], strides = [1, 1]} : vector<16x32xf32> to vector<8x32xf32>
    %cst_19 = arith.constant 0.000000e+00 : f32
    %43 = vector.broadcast %cst_19 : f32 to vector<8x32xf32>
    %44 = tpu.concatenate %42, %43 in 0 : vector<8x32xf32>, vector<8x32xf32> -> vector<16x32xf32>
    %45 = vector.extract_strided_slice %21 {offsets = [8, 8], sizes = [16, 16], strides = [1, 1]} : vector<32x32xf32> to vector<16x16xf32>
    %cst_20 = arith.constant dense<0xFF800000> : vector<16xf32>
    %46 = vector.multi_reduction <maximumf>, %45, %cst_20 [1] : vector<16x16xf32> to vector<16xf32>
    %47 = vector.shape_cast %46 : vector<16xf32> to vector<16x1xf32>
    %48 = vector.broadcast %47 : vector<16x1xf32> to vector<16x16xf32>
    %49 = arith.subf %45, %48 : vector<16x16xf32>
    %50 = math.exp %49 : vector<16x16xf32>
    %cst_21 = arith.constant dense<0.000000e+00> : vector<16xf32>
    %51 = vector.multi_reduction <add>, %50, %cst_21 [1] : vector<16x16xf32> to vector<16xf32>
    %52 = vector.shape_cast %51 : vector<16xf32> to vector<16x1xf32>
    %53 = tpu.reciprocal %52 {approx = true} : vector<16x1xf32> -> vector<16x1xf32>
    %54 = vector.broadcast %53 : vector<16x1xf32> to vector<16x16xf32>
    %55 = arith.mulf %50, %54 : vector<16x16xf32>
    %56 = arith.truncf %55 : vector<16x16xf32> to vector<16x16xbf16>
    %57 = vector.extract_strided_slice %20 {offsets = [8, 0], sizes = [16, 32], strides = [1, 1]} : vector<32x32xbf16> to vector<16x32xbf16>
    %cst_22 = arith.constant dense<0.000000e+00> : vector<16x32xf32>
    %58 = tpu.matmul %56, %57, %cst_22 {dimension_numbers = #tpu.dot_dimension_numbers<[1], [0], [0], [1], [0, 0, 1, 1], [], []>} : vector<16x16xbf16>, vector<16x32xbf16>, vector<16x32xf32> -> vector<16x32xf32>
    %59 = arith.addf %44, %58 : vector<16x32xf32>
    %c8_i32 = arith.constant 8 : i32
    %60 = arith.addi %12, %c8_i32 : i32
    %61 = tpu.assume_multiple %60, 8 : i32
    %62 = vector.extract_strided_slice %59 {offsets = [0, 0], sizes = [8, 32], strides = [1, 1]} : vector<16x32xf32> to vector<8x32xf32>
    %63 = arith.index_cast %61 : i32 to index
    %c0_23 = arith.constant 0 : index
    %64 = vector.load %arg7[%63, %c0_23] : memref<32x32xf32, #tpu.memory_space<vmem>>, vector<8x32xf32>
    tpu.vector_store %arg7[%63, %c0_23], %62 {strides = array<i32>} : memref<32x32xf32, #tpu.memory_space<vmem>>, vector<8x32xf32>,
    %65 = vector.extract_strided_slice %59 {offsets = [8, 0], sizes = [8, 32], strides = [1, 1]} : vector<16x32xf32> to vector<8x32xf32>
    %cst_24 = arith.constant 0.000000e+00 : f32
    %66 = vector.broadcast %cst_24 : f32 to vector<8x32xf32>
    %67 = tpu.concatenate %65, %66 in 0 : vector<8x32xf32>, vector<8x32xf32> -> vector<16x32xf32>
    %68 = vector.extract_strided_slice %21 {offsets = [16, 16], sizes = [16, 16], strides = [1, 1]} : vector<32x32xf32> to vector<16x16xf32>
    %cst_25 = arith.constant dense<0xFF800000> : vector<16xf32>
    %69 = vector.multi_reduction <maximumf>, %68, %cst_25 [1] : vector<16x16xf32> to vector<16xf32>
    %70 = vector.shape_cast %69 : vector<16xf32> to vector<16x1xf32>
    %71 = vector.broadcast %70 : vector<16x1xf32> to vector<16x16xf32>
    %72 = arith.subf %68, %71 : vector<16x16xf32>
    %73 = math.exp %72 : vector<16x16xf32>
    %cst_26 = arith.constant dense<0.000000e+00> : vector<16xf32>
    %74 = vector.multi_reduction <add>, %73, %cst_26 [1] : vector<16x16xf32> to vector<16xf32>
    %75 = vector.shape_cast %74 : vector<16xf32> to vector<16x1xf32>
    %76 = tpu.reciprocal %75 {approx = true} : vector<16x1xf32> -> vector<16x1xf32>
    %77 = vector.broadcast %76 : vector<16x1xf32> to vector<16x16xf32>
    %78 = arith.mulf %73, %77 : vector<16x16xf32>
    %79 = arith.truncf %78 : vector<16x16xf32> to vector<16x16xbf16>
    %80 = vector.extract_strided_slice %20 {offsets = [16, 0], sizes = [16, 32], strides = [1, 1]} : vector<32x32xbf16> to vector<16x32xbf16>
    %cst_27 = arith.constant dense<0.000000e+00> : vector<16x32xf32>
    %81 = tpu.matmul %79, %80, %cst_27 {dimension_numbers = #tpu.dot_dimension_numbers<[1], [0], [0], [1], [0, 0, 1, 1], [], []>} : vector<16x16xbf16>, vector<16x32xbf16>, vector<16x32xf32> -> vector<16x32xf32>
    %82 = arith.addf %67, %81 : vector<16x32xf32>
    %c16_i32 = arith.constant 16 : i32
    %83 = arith.addi %12, %c16_i32 : i32
    %84 = tpu.assume_multiple %83, 8 : i32
    %85 = vector.extract_strided_slice %82 {offsets = [0, 0], sizes = [8, 32], strides = [1, 1]} : vector<16x32xf32> to vector<8x32xf32>
    %86 = arith.index_cast %84 : i32 to index
    %c0_28 = arith.constant 0 : index
    %87 = vector.load %arg7[%86, %c0_28] : memref<32x32xf32, #tpu.memory_space<vmem>>, vector<8x32xf32>
    tpu.vector_store %arg7[%86, %c0_28], %85 {strides = array<i32>} : memref<32x32xf32, #tpu.memory_space<vmem>>, vector<8x32xf32>,
    %88 = vector.extract_strided_slice %82 {offsets = [8, 0], sizes = [8, 32], strides = [1, 1]} : vector<16x32xf32> to vector<8x32xf32>
    %cst_29 = arith.constant 0.000000e+00 : f32
    %89 = vector.broadcast %cst_29 : f32 to vector<8x32xf32>
    %90 = tpu.concatenate %88, %89 in 0 : vector<8x32xf32>, vector<8x32xf32> -> vector<16x32xf32>
    %c1_i32 = arith.constant 1 : i32
    %91 = vector.extract_strided_slice %90 {offsets = [0, 0], sizes = [8, 32], strides = [1, 1]} : vector<16x32xf32> to vector<8x32xf32>
    %c24 = arith.constant 24 : index
    %c0_30 = arith.constant 0 : index
    %92 = vector.load %arg7[%c24, %c0_30] : memref<32x32xf32, #tpu.memory_space<vmem>>, vector<8x32xf32>
    tpu.vector_store %arg7[%c24, %c0_30], %91 {strides = array<i32>} : memref<32x32xf32, #tpu.memory_space<vmem>>, vector<8x32xf32>,
    %c0_31 = arith.constant 0 : index
    %c0_32 = arith.constant 0 : index
    %c0_33 = arith.constant 0 : index
    %93 = vector.load %arg1[%c0_31, %c0_32, %c0_33] : memref<1x32x32xf32, #tpu.memory_space<vmem>>, vector<1x32x32xf32>
    %94 = vector.shape_cast %93 : vector<1x32x32xf32> to vector<32x32xf32>
    %95 = tpu.transpose %94, [1, 0] : vector<32x32xf32> -> vector<32x32xf32>
    %c0_34 = arith.constant 0 : index
    %c0_35 = arith.constant 0 : index
    %96 = vector.load %arg7[%c0_34, %c0_35] : memref<32x32xf32, #tpu.memory_space<vmem>>, vector<32x32xf32>
    %c0_36 = arith.constant 0 : index
    %c0_37 = arith.constant 0 : index
    %97 = vector.load %arg4[%c0_36, %c0_37] : memref<32x1xf32, #tpu.memory_space<vmem>>, vector<32x1xf32>
    %98 = vector.broadcast %97 : vector<32x1xf32> to vector<32x32xf32>
    %99 = arith.mulf %96, %98 : vector<32x32xf32>
    %100 = arith.addf %99, %95 : vector<32x32xf32>
    %c0_38 = arith.constant 0 : index
    %c0_39 = arith.constant 0 : index
    %101 = vector.load %arg7[%c0_38, %c0_39] : memref<32x32xf32, #tpu.memory_space<vmem>>, vector<32x32xf32>
    tpu.vector_store %arg7[%c0_38, %c0_39], %100 {strides = array<i32>} : memref<32x32xf32, #tpu.memory_space<vmem>>, vector<32x32xf32>,
    %c0_40 = arith.constant 0 : index
    %c0_41 = arith.constant 0 : index
    %102 = tpu.strided_load %arg7[%c0_40, %c0_41] {strides = array<i32: 2, 1>} : memref<32x32xf32, #tpu.memory_space<vmem>>, vector<16x32xf32>
    %c1 = arith.constant 1 : index
    %c0_42 = arith.constant 0 : index
    %103 = tpu.strided_load %arg7[%c1, %c0_42] {strides = array<i32: 2, 1>} : memref<32x32xf32, #tpu.memory_space<vmem>>, vector<16x32xf32>
    %104 = arith.maximumf %102, %103 : vector<16x32xf32>
    %105 = tpu.transpose %104, [1, 0] : vector<16x32xf32> -> vector<32x16xf32>
    %c0_43 = arith.constant 0 : index
    %c0_44 = arith.constant 0 : index
    %c0_45 = arith.constant 0 : index
    %106 = vector.load %arg5[%c0_43, %c0_44, %c0_45] : memref<1x32x16xf32, #tpu.memory_space<vmem>>, vector<1x32x16xf32>
    %107 = vector.shape_cast %106 : vector<1x32x16xf32> to vector<32x16xf32>
    %108 = vector.shape_cast %105 : vector<32x16xf32> to vector<1x32x16xf32>
    tpu.vector_store %arg5[%c0_43, %c0_44, %c0_45], %108 {strides = array<i32>} : memref<1x32x16xf32, #tpu.memory_space<vmem>>, vector<1x32x16xf32>,
    return
  }
  func.func @transform_0(%arg0: i32) -> (i32, i32, i32) {
    %c0_i32 = arith.constant 0 : i32
    %c0_i32_0 = arith.constant 0 : i32
    %c0_i32_1 = arith.constant 0 : i32
    return %arg0, %c0_i32, %c0_i32_0 : i32, i32, i32
  }
  func.func @transform_1(%arg0: i32) -> (i32, i32) {
    %c0_i32 = arith.constant 0 : i32
    %c0_i32_0 = arith.constant 0 : i32
    %c0_i32_1 = arith.constant 0 : i32
    return %c0_i32, %c0_i32_0 : i32, i32
  }
  func.func @transform_2(%arg0: i32) -> (i32, i32) {
    %c0_i32 = arith.constant 0 : i32
    %c0_i32_0 = arith.constant 0 : i32
    %c0_i32_1 = arith.constant 0 : i32
    return %c0_i32, %c0_i32_0 : i32, i32
  }
  func.func @transform_3(%arg0: i32) -> (i32, i32) {
    %c0_i32 = arith.constant 0 : i32
    %c0_i32_0 = arith.constant 0 : i32
    %c0_i32_1 = arith.constant 0 : i32
    return %c0_i32, %c0_i32_0 : i32, i32
  }
  func.func @transform_4(%arg0: i32) -> (i32, i32, i32) {
    %c0_i32 = arith.constant 0 : i32
    %c0_i32_0 = arith.constant 0 : i32
    %c0_i32_1 = arith.constant 0 : i32
    return %arg0, %c0_i32, %c0_i32_0 : i32, i32, i32
  }
}

</mosaic_0001>

<llo_original>
// kernel: tpu_custom_call.1
$region0: #{tpu_custom_call.1}
  #allocation0 [shape = 'u32[]', space=smem, size = 0x4, offset = 0x4, fixed_abs, tag = 'smem constant byte address 0x4 - core index']
  #allocation1 [shape = 'u32[72,128]{1,0:T(1,128)}', space=vmem, size = 0x9000, scoped, tag = 'internal scratch']
  #allocation2 [shape = 'f32[32,40]{1,0:T(8,128)}', space=vmem, size = 0x4000, scoped, tag = 'scratch operand']
  #allocation3 [shape = 'f32[32,32]{1,0:T(8,128)}', space=vmem, size = 0x4000, scoped, tag = 'scratch operand']
  %s0 = inlined_call_operand.hbm [shape: f32[2,32,32], index: 0, kind: input, shape index: {}]
  %s1 = inlined_call_operand.vmem [shape: f32[32,40], index: 1, kind: input, shape index: {}]
  %s2 = inlined_call_operand.vmem [shape: f32[1,40], index: 2, kind: input, shape index: {}]
  %s3 = inlined_call_operand.vmem [shape: f32[32,1], index: 3, kind: input, shape index: {}]
  %s4 = inlined_call_operand.vmem [shape: f32[2,32,16], index: 4, kind: output, shape index: {}]
  %s5 = sld [smem:[#allocation0]]
  $region53: #{tpu_custom_call.1} parent=0
    _
  %s7 = ssub.s32 1, %s5
  %s8 = scalar_select 0, %s7, %s5
  $region1: #{tpu_custom_call.1} parent=0
    #allocation4 [shape = 'u8[32768]{0}', space=vmem, size = 0x8000, scoped, tag = 'input window, operand 0']
    #allocation5 [shape = 's32[2]{0}', space=sflag, size = 0x8, scoped, tag = 'scoped memory for tpu_custom_call.1']
    %9 = vsyncpa [#allocation5], 0
    %s10 = scalar_lea.sflag [#allocation5], 1
    %11 = vsyncpa %s10, 0
    loop: start=0, step=1, limit=4
    $region2: #{tpu_custom_call.1} parent=1 // loop_pre_header
      _
    $region3: #{tpu_custom_call.1} parent=1 // loop_header
      %s13 = sphi 0, %s17
      %p14 = scmp.ge.s32.totalorder %s13, 4
      %s23 = sphi 0, %s25
      %s26 = sphi 0, %s23
      %s27 = sphi 0, %s26
      %s43 = sphi 0, %s27
      %s47 = sphi 0, %s47
      %s49 = sphi 0, %s47
      %s50 = sphi 0, %s49
      %s64 = sphi 0, %s50
      %s68 = sphi 0, %s68
      %s70 = sphi 0, %s68
      %s71 = sphi 0, %s70
      %s85 = sphi 0, %s71
      %s89 = sphi 0, %s89
      %s91 = sphi 0, %s89
      %s92 = sphi 0, %s91
      %s106 = sphi 0, %s92
      %s112 = sphi 0, %s114
      %s115 = sphi 0, %s112
      %s116 = sphi 0, %s115
      %s132 = sphi 0, %s116
    $region4: #{tpu_custom_call.1} parent=1 // loop_header_branch
      %16 = sbr.rel (%p14) target = $region8
    $region5: #{tpu_custom_call.1} parent=1 // loop_body
      %s18 = ssub.s32 %s13, 1
      %s19 = ssub.s32 %s13, 2
      %s20 = sadd.s32 %s13, 1
      %s21 = ssub.s32 %s13, %s20
      %p22 = scmp.eq.s32.totalorder %s21, 0
      %s24 = sadd.s32 %s23, 1
      %s25 = scalar_select %p22, %s23, %s24
      %p28 = pneg %p22
      %p29 = scmp.eq.s32.totalorder %s13, 1
      %p30 = por %p28, %p29
      %p31 = scmp.ne.s32.totalorder %s23, %s26
      %p32 = scmp.eq.s32.totalorder %s13, 0
      %p33 = por %p31, %p32
      %p34 = scmp.ne.s32.totalorder %s23, %s26
      %p35 = scmp.eq.s32.totalorder %s18, 1
      %p36 = por %p34, %p35
      %p37 = scmp.ne.s32.totalorder %s26, %s27
      %p38 = scmp.eq.s32.totalorder %s18, 0
      %p39 = por %p37, %p38
      %p40 = scmp.ne.s32.totalorder %s26, %s27
      %p41 = scmp.eq.s32.totalorder %s19, 1
      %p42 = por %p40, %p41
      %p44 = scmp.ne.s32.totalorder %s27, %s43
      %p45 = scmp.eq.s32.totalorder %s19, 0
      %p46 = por %p44, %p45
      %s48 = sadd.s32 %s47, 1
      %p51 = scmp.eq.s32.totalorder %s13, 1
      %p52 = scmp.ne.s32.totalorder %s47, %s49
      %p53 = scmp.eq.s32.totalorder %s13, 0
      %p54 = por %p52, %p53
      %p55 = scmp.ne.s32.totalorder %s47, %s49
      %p56 = scmp.eq.s32.totalorder %s18, 1
      %p57 = por %p55, %p56
      %p58 = scmp.ne.s32.totalorder %s49, %s50
      %p59 = scmp.eq.s32.totalorder %s18, 0
      %p60 = por %p58, %p59
      %p61 = scmp.ne.s32.totalorder %s49, %s50
      %p62 = scmp.eq.s32.totalorder %s19, 1
      %p63 = por %p61, %p62
      %p65 = scmp.ne.s32.totalorder %s50, %s64
      %p66 = scmp.eq.s32.totalorder %s19, 0
      %p67 = por %p65, %p66
      %s69 = sadd.s32 %s68, 1
      %p72 = scmp.eq.s32.totalorder %s13, 1
      %p73 = scmp.ne.s32.totalorder %s68, %s70
      %p74 = scmp.eq.s32.totalorder %s13, 0
      %p75 = por %p73, %p74
      %p76 = scmp.ne.s32.totalorder %s68, %s70
      %p77 = scmp.eq.s32.totalorder %s18, 1
      %p78 = por %p76, %p77
      %p79 = scmp.ne.s32.totalorder %s70, %s71
      %p80 = scmp.eq.s32.totalorder %s18, 0
      %p81 = por %p79, %p80
      %p82 = scmp.ne.s32.totalorder %s70, %s71
      %p83 = scmp.eq.s32.totalorder %s19, 1
      %p84 = por %p82, %p83
      %p86 = scmp.ne.s32.totalorder %s71, %s85
      %p87 = scmp.eq.s32.totalorder %s19, 0
      %p88 = por %p86, %p87
      %s90 = sadd.s32 %s89, 1
      %p93 = scmp.eq.s32.totalorder %s13, 1
      %p94 = scmp.ne.s32.totalorder %s89, %s91
      %p95 = scmp.eq.s32.totalorder %s13, 0
      %p96 = por %p94, %p95
      %p97 = scmp.ne.s32.totalorder %s89, %s91
      %p98 = scmp.eq.s32.totalorder %s18, 1
      %p99 = por %p97, %p98
      %p100 = scmp.ne.s32.totalorder %s91, %s92
      %p101 = scmp.eq.s32.totalorder %s18, 0
      %p102 = por %p100, %p101
      %p103 = scmp.ne.s32.totalorder %s91, %s92
      %p104 = scmp.eq.s32.totalorder %s19, 1
      %p105 = por %p103, %p104
      %p107 = scmp.ne.s32.totalorder %s92, %s106
      %p108 = scmp.eq.s32.totalorder %s19, 0
      %p109 = por %p107, %p108
      %s110 = ssub.s32 %s13, %s20
      %p111 = scmp.eq.s32.totalorder %s110, 0
      %s113 = sadd.s32 %s112, 1
      %s114 = scalar_select %p111, %s112, %s113
      %p117 = pneg %p111
      %p118 = scmp.eq.s32.totalorder %s13, 1
      %p119 = por %p117, %p118
      %p120 = scmp.ne.s32.totalorder %s112, %s115
      %p121 = scmp.eq.s32.totalorder %s13, 0
      %p122 = por %p120, %p121
      %p123 = scmp.ne.s32.totalorder %s112, %s115
      %p124 = scmp.eq.s32.totalorder %s18, 1
      %p125 = por %p123, %p124
      %p126 = scmp.ne.s32.totalorder %s115, %s116
      %p127 = scmp.eq.s32.totalorder %s18, 0
      %p128 = por %p126, %p127
      %p129 = scmp.ne.s32.totalorder %s115, %s116
      %p130 = scmp.eq.s32.totalorder %s19, 1
      %p131 = por %p129, %p130
      %p133 = scmp.ne.s32.totalorder %s116, %s132
      %p134 = scmp.eq.s32.totalorder %s19, 0
      %p135 = por %p133, %p134
      %p136 = scmp.le.s32.totalorder 1, %s13
      %p137 = scmp.lt.s32.totalorder %s13, 3
      %p138 = pnand %p136, %p137
      %p139 = pneg %p138
      // Predicated region
      $region9: #{tpu_custom_call.1} parent=5 // pred_check
        _
      $region10: #{tpu_custom_call.1} parent=5 // pred_check_branch
        %141 = sbr.rel (%p138) target = $region12
      $region11: #{tpu_custom_call.1} parent=5 // pred_region
        %s142 = ssub.s32 %s13, 1
        // Predicated region
        $region13: #{tpu_custom_call.1} parent=11 // pred_check
          %p143 = pneg %p60
        $region14: #{tpu_custom_call.1} parent=11 // pred_check_branch
          %145 = sbr.rel (%p143) target = $region16
        $region15: #{tpu_custom_call.1} parent=11 // pred_region
          _
        $region16: #{tpu_custom_call.1} parent=11 // pred_fallthru
          _
        // Predicated region
        $region17: #{tpu_custom_call.1} parent=11 // pred_check
          %p146 = pneg %p81
        $region18: #{tpu_custom_call.1} parent=11 // pred_check_branch
          %148 = sbr.rel (%p146) target = $region20
        $region19: #{tpu_custom_call.1} parent=11 // pred_region
          _
        $region20: #{tpu_custom_call.1} parent=11 // pred_fallthru
          _
        // Predicated region
        $region21: #{tpu_custom_call.1} parent=11 // pred_check
          %p149 = pneg %p102
        $region22: #{tpu_custom_call.1} parent=11 // pred_check_branch
          %151 = sbr.rel (%p149) target = $region24
        $region23: #{tpu_custom_call.1} parent=11 // pred_region
          _
        $region24: #{tpu_custom_call.1} parent=11 // pred_fallthru
          _
      $region12: #{tpu_custom_call.1} parent=5 // pred_fallthru
        _
      %p152 = scmp.lt.s32.totalorder %s13, 2
      // Predicated region
      $region25: #{tpu_custom_call.1} parent=5 // pred_check
        %p153 = pneg %p152
      $region26: #{tpu_custom_call.1} parent=5 // pred_check_branch
        %155 = sbr.rel (%p153) target = $region28
      $region27: #{tpu_custom_call.1} parent=5 // pred_region
        // Predicated region
        $region29: #{tpu_custom_call.1} parent=27 // pred_check
          %p156 = pneg %p33
        $region30: #{tpu_custom_call.1} parent=27 // pred_check_branch
          %158 = sbr.rel (%p156) target = $region32
        $region31: #{tpu_custom_call.1} parent=27 // pred_region
          %s159 = sand.u32 %s23, 1
          %s160 = scalar_lea.sflag [#allocation5], %s159
          %s161 = sand.u32 %s23, 1
          %s162 = smul.addr %s161, 32
          %s163 = scalar_lea.vmem [#allocation4], %s162
          %165 = vsyncadd %s160, 0
          %s166 = smul.addr %s13, 4
          %s167 = smul.addr %s166, 8
          %s168 = scalar_lea.hbm %s0, %s167
          %s169 = sshll.u32 %s168, 4
          %s170 = int_to_ptr.hbm [resolvable:$true] %s169
          %s171 = sshll.u32 %s163, 4
          %s172 = int_to_ptr.vmem [resolvable:$true] %s171
          %177 = dma.hbm_to_vmem [thread:$0]  %s170, 512, %s172, %s160, 128, 128, 8
        $region32: #{tpu_custom_call.1} parent=27 // pred_fallthru
          _
      $region28: #{tpu_custom_call.1} parent=5 // pred_fallthru
        _
      %p178 = scmp.le.s32.totalorder 1, %s13
      %p179 = scmp.lt.s32.totalorder %s13, 3
      %p180 = pnand %p178, %p179
      %p181 = pneg %p180
      // Predicated region
      $region33: #{tpu_custom_call.1} parent=5 // pred_check
        _
      $region34: #{tpu_custom_call.1} parent=5 // pred_check_branch
        %183 = sbr.rel (%p180) target = $region36
      $region35: #{tpu_custom_call.1} parent=5 // pred_region
        %s184 = ssub.s32 %s13, 1
        %s185 = sand.u32 %s26, 1
        %s186 = scalar_lea.sflag [#allocation5], %s185
        %s187 = sand.u32 %s26, 1
        %s188 = smul.addr %s187, 32
        %s189 = scalar_lea.vmem [#allocation4], %s188
        // Predicated region
        $region37: #{tpu_custom_call.1} parent=35 // pred_check
          %p190 = pneg %p39
        $region38: #{tpu_custom_call.1} parent=35 // pred_check_branch
          %192 = sbr.rel (%p190) target = $region40
        $region39: #{tpu_custom_call.1} parent=35 // pred_region
          %194 = dma.done %s186, 512
        $region40: #{tpu_custom_call.1} parent=35 // pred_fallthru
          _
        %s195 = sand.u32 %s26, 1
        %s196 = scalar_lea.sflag [#allocation5], %s195
        %s197 = sand.u32 %s26, 1
        %s198 = smul.addr %s197, 32
        %s199 = scalar_lea.vmem [#allocation4], %s198
        %p200 = pneg %p39
        %p201 = pneg %p36
        %p202 = pneg %p60
        %p203 = pneg %p57
        %p204 = pneg %p81
        %p205 = pneg %p78
        %p206 = pneg %p102
        %p207 = pneg %p99
        %p208 = pneg %p128
        %p209 = pneg %p125
        %p210 = scmp.lt.s32.totalorder %s18, 1
        %s211 = scalar_select %p210, %s18, 1
        %s212 = smul.addr %s211, 4
        %s213 = smul.addr %s212, 8
        %s214 = scalar_lea.vmem %s4, %s213
        %p215 = scmp.lt.s32.totalorder %s18, 1
        %s216 = scalar_select %p215, %s18, 1
        %s217 = smul.addr %s216, 4
        %s218 = smul.addr %s217, 8
        %s219 = scalar_lea.vmem %s4, %s218
        %v221 = vld [vmem:[%s189] sm:$0xff]
        %v222 = vld [vmem:[%s189 + $0x8] sm:$0xff]
        %v223 = vld [vmem:[%s189 + $0x10] sm:$0xff]
        %v224 = vld [vmem:[%s189 + $0x18] sm:$0xff]
        %v225 = vld [vmem:[%s1] sm:$0xff]
        %v226 = vld [vmem:[%s1 + $0x8] sm:$0xff]
        %v227 = vld [vmem:[%s1 + $0x10] sm:$0xff]
        %v228 = vld [vmem:[%s1 + $0x18] sm:$0xff]
        %v229 = vld [vmem:[%s2] sm:$0x1]
        %v231 = vperm.slane %v229, 0
        %233 = vxpose.xlu0.b32.start [1/16] %v221, 128
        %234 = vxpose.xlu0.b32.cont [2/16] %v222, 128
        %235 = vxpose.xlu0.b32.cont [3/16] %v223, 128
        %236 = vxpose.xlu0.b32.cont [4/16] %v224, 128
        %237 = vxpose.xlu0.b32.cont [5/16] 0.0, 128
        %238 = vxpose.xlu0.b32.cont [6/16] 0.0, 128
        %239 = vxpose.xlu0.b32.cont [7/16] 0.0, 128
        %240 = vxpose.xlu0.b32.cont [8/16] 0.0, 128
        %241 = vxpose.xlu0.b32.cont [9/16] 0.0, 128
        %242 = vxpose.xlu0.b32.cont [10/16] 0.0, 128
        %243 = vxpose.xlu0.b32.cont [11/16] 0.0, 128
        %244 = vxpose.xlu0.b32.cont [12/16] 0.0, 128
        %245 = vxpose.xlu0.b32.cont [13/16] 0.0, 128
        %246 = vxpose.xlu0.b32.cont [14/16] 0.0, 128
        %247 = vxpose.xlu0.b32.cont [15/16] 0.0, 128
        %248 = vxpose.xlu0.b32.end [16/16] 0.0, 128
        %v249 = vpop.trf.xlu0
        %v250 = vpop.trf.xlu0
        %v251 = vpop.trf.xlu0
        %v252 = vpop.trf.xlu0
        %v253 = vpop.trf.xlu0
        %v254 = vpop.trf.xlu0
        %v255 = vpop.trf.xlu0
        %v256 = vpop.trf.xlu0
        %v257 = vpop.trf.xlu0
        %v258 = vpop.trf.xlu0
        %v259 = vpop.trf.xlu0
        %v260 = vpop.trf.xlu0
        %v261 = vpop.trf.xlu0
        %v262 = vpop.trf.xlu0
        %v263 = vpop.trf.xlu0
        %v264 = vpop.trf.xlu0
        %vm265 = vcmask 261120
        %v267 = vsel %vm265, %v249, 0
        %v270 = vsel %vm265, %v250, 0
        %v273 = vsel %vm265, %v251, 0
        %v276 = vsel %vm265, %v252, 0
        %278 = vmatpush.msra.mxu0 0.0
        %279 = vmatpush.msra.mxu0 0.0
        %280 = vmatpush.msra.mxu0 0.0
        %281 = vmatpush.msra.mxu0 0.0
        %282 = vmatpush.msra.mxu0 0.0
        %283 = vmatpush.msra.mxu0 0.0
        %284 = vmatpush.msra.mxu0 0.0
        %285 = vmatpush.msra.mxu0 0.0
        %286 = vmatpush.msra.mxu0 0.0
        %287 = vmatpush.msra.mxu0 0.0
        %288 = vmatpush.msra.mxu0 0.0
        %289 = vmatpush.msra.mxu0 0.0
        %290 = vmatpush.msra.mxu0 %v228
        %291 = vmatpush.msra.mxu0 %v227
        %292 = vmatpush.msra.mxu0 %v226
        %293 = vmatpush.msra.mxu0 %v225
        %294 = vmatmul.f32.gmra.mxu0 %v267
        %v295 = vpop.f32.mrf.mxu0
        %v296 = vadd.f32 %v231, %v295
        %297 = vmatmul.f32.gmra.mxu0 %v270
        %v298 = vpop.f32.mrf.mxu0
        %v299 = vadd.f32 %v231, %v298
        %300 = vmatmul.f32.gmra.mxu0 %v273
        %v301 = vpop.f32.mrf.mxu0
        %v302 = vadd.f32 %v231, %v301
        %303 = vmatmul.f32.gmra.mxu0 %v276
        %v304 = vpop.f32.mrf.mxu0
        %v305 = vadd.f32 %v231, %v304
        %306 = vdwg.mxu0
        %vm307 = vcmask 326656
        %308 = vst.msk [vmem:[#allocation2] sm:$0xff] %vm307, %v296
        %309 = vst.msk [vmem:[#allocation2 + $0x8] sm:$0xff] %vm307, %v299
        %310 = vst.msk [vmem:[#allocation2 + $0x10] sm:$0xff] %vm307, %v302
        %311 = vst.msk [vmem:[#allocation2 + $0x18] sm:$0xff] %vm307, %v305
        %312 = vst.msk [vmem:[#allocation3] sm:$0xff] %vm265, 0.0
        %313 = vst.msk [vmem:[#allocation3 + $0x8] sm:$0xff] %vm265, 0.0
        %314 = vst.msk [vmem:[#allocation3 + $0x10] sm:$0xff] %vm265, 0.0
        %315 = vst.msk [vmem:[#allocation3 + $0x18] sm:$0xff] %vm265, 0.0
        %v316 = vld [vmem:[#allocation2] sm:$0xff]
        %v317 = vld [vmem:[#allocation2 + $0x8] sm:$0xff]
        %v318 = vld [vmem:[#allocation2 + $0x10] sm:$0xff]
        %v319 = vld [vmem:[#allocation2 + $0x18] sm:$0xff]
        %v320 = vpack.c.bf16 %v317, %v316
        %v321 = vpack.c.bf16 %v319, %v318
        %v322 = vpack.c.bf16 %v316, %v316
        %v323 = vpack.c.bf16 %v317, %v317
        %v324 = vpack.c.bf16 %v318, %v318
        %v325 = vpack.c.bf16 %v319, %v319
        %328 = vrot.lane.b32.xlu0 %v320, 124
        %v329 = vpop.permute.xlu0 %328
        %330 = vrot.lane.b32.xlu0 %v321, 124
        %v331 = vpop.permute.xlu0 %330
        %vm332 = vcmask 31744
        %v334 = vsel %vm332, %v320, 0
        %v337 = vsel %vm332, %v321, 0
        %v340 = vsel %vm332, %v329, 0
        %v343 = vsel %vm332, %v331, 0
        %345 = vmatpush.bf16.xpose.msra.mxu0 0
        %346 = vmatpush.bf16.xpose.msra.mxu0 0
        %347 = vmatpush.bf16.xpose.msra.mxu0 0
        %348 = vmatpush.bf16.xpose.msra.mxu0 0
        %349 = vmatpush.bf16.xpose.msra.mxu0 0
        %350 = vmatpush.bf16.xpose.msra.mxu0 0
        %351 = vmatpush.bf16.xpose.msra.mxu0 %v343
        %352 = vmatpush.bf16.xpose.msra.mxu0 %v340
        %353 = vmatmul.bf16.gmra.mxu0 %v334
        %v354 = vpop.f32.mrf.mxu0
        %v355 = vadd.f32 0.0, %v354
        %v356 = vpop.f32.mrf.mxu0
        %v357 = vadd.f32 0.0, %v356
        %358 = vmatmul.bf16.gmra.mxu0 %v337
        %v359 = vpop.f32.mrf.mxu0
        %v360 = vadd.f32 0.0, %v359
        %v361 = vpop.f32.mrf.mxu0
        %v362 = vadd.f32 0.0, %v361
        %363 = vdwg.mxu0
        %vm364 = vcmask 130048
        %v365 = vsel %vm364, %v355, -inf
        %366 = vmax.xlane.f32.xlu0 %v365
        %v367 = vpop.xlane.xlu0 %366
        %v368 = vsel %vm364, %v357, -inf
        %369 = vmax.xlane.f32.xlu0 %v368
        %v370 = vpop.xlane.xlu0 %369
        %v371 = vsub.f32 %v355, %v367
        %v372 = vsub.f32 %v357, %v370
        %v373 = vmul.f32 %v371, 1.442695
        %v374 = vpow.pop %v373
        %v375 = vmul.f32 %v372, 1.442695
        %v376 = vpow.pop %v375
        %v377 = vsel %vm364, %v374, 0.0
        %378 = vadd.xlane.f32.xlu0 %v377
        %v379 = vpop.xlane.xlu0 %378
        %v380 = vsel %vm364, %v376, 0.0
        %381 = vadd.xlane.f32.xlu0 %v380
        %v382 = vpop.xlane.xlu0 %381
        %v383 = vrcp.pop %v379
        %v384 = vrcp.pop %v382
        %v385 = vmul.f32 %v374, %v383
        %v386 = vmul.f32 %v376, %v384
        %v387 = vpack.c.bf16 %v386, %v385
        %v390 = vunpack.c.l.b16 %v322
        %v391 = vunpack.c.l.b16 %v323
        %v392 = vpack.c.b16 %v391, %v390
        %393 = vrot.lane.b32.xlu0 %v392, 120
        %v394 = vpop.permute.xlu0 %393
        %v397 = vsel %vm364, %v387, 0
        %399 = vmatpush.bf16.msra.mxu0 0
        %400 = vmatpush.bf16.msra.mxu0 0
        %401 = vmatpush.bf16.msra.mxu0 0
        %402 = vmatpush.bf16.msra.mxu0 0
        %403 = vmatpush.bf16.msra.mxu0 0
        %404 = vmatpush.bf16.msra.mxu0 0
        %405 = vmatpush.bf16.msra.mxu0 0
        %406 = vmatpush.bf16.msra.mxu0 %v394
        %407 = vmatmul.bf16.gmra.mxu0 %v397
        %v408 = vpop.f32.mrf.mxu0
        %v409 = vadd.f32 0.0, %v408
        %v410 = vpop.f32.mrf.mxu0
        %v411 = vadd.f32 0.0, %v410
        %412 = vdwg.mxu0
        %413 = vst.msk [vmem:[#allocation3] sm:$0xff] %vm265, %v409
        %vm414 = vcmask 195648
        %v415 = vsel %vm414, %v357, -inf
        %416 = vmax.xlane.f32.xlu0 %v415
        %v417 = vpop.xlane.xlu0 %416
        %v418 = vsel %vm414, %v360, -inf
        %419 = vmax.xlane.f32.xlu0 %v418
        %v420 = vpop.xlane.xlu0 %419
        %v421 = vsub.f32 %v357, %v417
        %v422 = vsub.f32 %v360, %v420
        %v423 = vmul.f32 %v421, 1.442695
        %v424 = vpow.pop %v423
        %v425 = vmul.f32 %v422, 1.442695
        %v426 = vpow.pop %v425
        %429 = vrot.lane.b32.xlu0 %v424, 120
        %v430 = vpop.permute.xlu0 %429
        %431 = vrot.lane.b32.xlu0 %v426, 120
        %v432 = vpop.permute.xlu0 %431
        %v435 = vsel %vm364, %v430, 0.0
        %436 = vadd.xlane.f32.xlu0 %v435
        %v437 = vpop.xlane.xlu0 %436
        %v438 = vsel %vm364, %v432, 0.0
        %439 = vadd.xlane.f32.xlu0 %v438
        %v440 = vpop.xlane.xlu0 %439
        %v441 = vrcp.pop %v437
        %v442 = vrcp.pop %v440
        %v443 = vmul.f32 %v424, %v441
        %v444 = vmul.f32 %v426, %v442
        %v445 = vpack.c.bf16 %v444, %v443
        %447 = vrot.lane.b32.xlu0 %v445, 120
        %v448 = vpop.permute.xlu0 %447
        %v450 = vunpack.c.l.b16 %v324
        %v451 = vpack.c.b16 %v450, %v391
        %452 = vrot.lane.b32.xlu0 %v451, 120
        %v453 = vpop.permute.xlu0 %452
        %v456 = vsel %vm364, %v448, 0
        %458 = vmatpush.bf16.msra.mxu0 0
        %459 = vmatpush.bf16.msra.mxu0 0
        %460 = vmatpush.bf16.msra.mxu0 0
        %461 = vmatpush.bf16.msra.mxu0 0
        %462 = vmatpush.bf16.msra.mxu0 0
        %463 = vmatpush.bf16.msra.mxu0 0
        %464 = vmatpush.bf16.msra.mxu0 0
        %465 = vmatpush.bf16.msra.mxu0 %v453
        %466 = vmatmul.bf16.gmra.mxu0 %v456
        %v467 = vpop.f32.mrf.mxu0
        %v468 = vadd.f32 0.0, %v467
        %v469 = vpop.f32.mrf.mxu0
        %v470 = vadd.f32 0.0, %v469
        %471 = vdwg.mxu0
        %v472 = vadd.f32 %v411, %v468
        %v473 = vadd.f32 %v470, 0.0
        %s474 = sadd.s32 0, 8
        %s475 = scalar_lea.vmem [#allocation3], %s474
        %476 = vst.msk [vmem:[%s475] sm:$0xff] %vm265, %v472
        %vm477 = vcmask 261248
        %v478 = vsel %vm477, %v360, -inf
        %479 = vmax.xlane.f32.xlu0 %v478
        %v480 = vpop.xlane.xlu0 %479
        %v481 = vsel %vm477, %v362, -inf
        %482 = vmax.xlane.f32.xlu0 %v481
        %v483 = vpop.xlane.xlu0 %482
        %v484 = vsub.f32 %v360, %v480
        %v485 = vsub.f32 %v362, %v483
        %v486 = vmul.f32 %v484, 1.442695
        %v487 = vpow.pop %v486
        %v488 = vmul.f32 %v485, 1.442695
        %v489 = vpow.pop %v488
        %492 = vrot.lane.b32.xlu0 %v487, 112
        %v493 = vpop.permute.xlu0 %492
        %494 = vrot.lane.b32.xlu0 %v489, 112
        %v495 = vpop.permute.xlu0 %494
        %v498 = vsel %vm364, %v493, 0.0
        %499 = vadd.xlane.f32.xlu0 %v498
        %v500 = vpop.xlane.xlu0 %499
        %v501 = vsel %vm364, %v495, 0.0
        %502 = vadd.xlane.f32.xlu0 %v501
        %v503 = vpop.xlane.xlu0 %502
        %v504 = vrcp.pop %v500
        %v505 = vrcp.pop %v503
        %v506 = vmul.f32 %v487, %v504
        %v507 = vmul.f32 %v489, %v505
        %v508 = vpack.c.bf16 %v507, %v506
        %510 = vrot.lane.b32.xlu0 %v508, 112
        %v511 = vpop.permute.xlu0 %510
        %v513 = vunpack.c.l.b16 %v325
        %v514 = vpack.c.b16 %v513, %v450
        %515 = vrot.lane.b32.xlu0 %v514, 120
        %v516 = vpop.permute.xlu0 %515
        %v519 = vsel %vm364, %v511, 0
        %521 = vmatpush.bf16.msra.mxu0 0
        %522 = vmatpush.bf16.msra.mxu0 0
        %523 = vmatpush.bf16.msra.mxu0 0
        %524 = vmatpush.bf16.msra.mxu0 0
        %525 = vmatpush.bf16.msra.mxu0 0
        %526 = vmatpush.bf16.msra.mxu0 0
        %527 = vmatpush.bf16.msra.mxu0 0
        %528 = vmatpush.bf16.msra.mxu0 %v516
        %529 = vmatmul.bf16.gmra.mxu0 %v519
        %v530 = vpop.f32.mrf.mxu0
        %v531 = vadd.f32 0.0, %v530
        %v532 = vpop.f32.mrf.mxu0
        %v533 = vadd.f32 0.0, %v532
        %534 = vdwg.mxu0
        %v535 = vadd.f32 %v473, %v531
        %v536 = vadd.f32 %v533, 0.0
        %s537 = sadd.s32 0, 16
        %s538 = scalar_lea.vmem [#allocation3], %s537
        %539 = vst.msk [vmem:[%s538] sm:$0xff] %vm265, %v535
        %540 = vst.msk [vmem:[#allocation3 + $0x18] sm:$0xff] %vm265, %v536
        %v541 = vld [vmem:[%s189] sm:$0xff]
        %v542 = vld [vmem:[%s189 + $0x8] sm:$0xff]
        %v543 = vld [vmem:[%s189 + $0x10] sm:$0xff]
        %v544 = vld [vmem:[%s189 + $0x18] sm:$0xff]
        %545 = vxpose.xlu0.b32.start [1/16] %v541, 128
        %546 = vxpose.xlu0.b32.cont [2/16] %v542, 128
        %547 = vxpose.xlu0.b32.cont [3/16] %v543, 128
        %548 = vxpose.xlu0.b32.cont [4/16] %v544, 128
        %549 = vxpose.xlu0.b32.cont [5/16] 0.0, 128
        %550 = vxpose.xlu0.b32.cont [6/16] 0.0, 128
        %551 = vxpose.xlu0.b32.cont [7/16] 0.0, 128
        %552 = vxpose.xlu0.b32.cont [8/16] 0.0, 128
        %553 = vxpose.xlu0.b32.cont [9/16] 0.0, 128
        %554 = vxpose.xlu0.b32.cont [10/16] 0.0, 128
        %555 = vxpose.xlu0.b32.cont [11/16] 0.0, 128
        %556 = vxpose.xlu0.b32.cont [12/16] 0.0, 128
        %557 = vxpose.xlu0.b32.cont [13/16] 0.0, 128
        %558 = vxpose.xlu0.b32.cont [14/16] 0.0, 128
        %559 = vxpose.xlu0.b32.cont [15/16] 0.0, 128
        %560 = vxpose.xlu0.b32.end [16/16] 0.0, 128
        %v561 = vpop.trf.xlu0
        %v562 = vpop.trf.xlu0
        %v563 = vpop.trf.xlu0
        %v564 = vpop.trf.xlu0
        %v565 = vpop.trf.xlu0
        %v566 = vpop.trf.xlu0
        %v567 = vpop.trf.xlu0
        %v568 = vpop.trf.xlu0
        %v569 = vpop.trf.xlu0
        %v570 = vpop.trf.xlu0
        %v571 = vpop.trf.xlu0
        %v572 = vpop.trf.xlu0
        %v573 = vpop.trf.xlu0
        %v574 = vpop.trf.xlu0
        %v575 = vpop.trf.xlu0
        %v576 = vpop.trf.xlu0
        %v577 = vld [vmem:[#allocation3] sm:$0xff]
        %v578 = vld [vmem:[#allocation3 + $0x8] sm:$0xff]
        %v579 = vld [vmem:[#allocation3 + $0x10] sm:$0xff]
        %v580 = vld [vmem:[#allocation3 + $0x18] sm:$0xff]
        %v581 = vld [vmem:[%s3] sm:$0xff]
        %v582 = vld [vmem:[%s3 + $0x8] sm:$0xff]
        %v583 = vld [vmem:[%s3 + $0x10] sm:$0xff]
        %v584 = vld [vmem:[%s3 + $0x18] sm:$0xff]
        %586 = vset.pattern.permute.xlu0 0
        %587 = vperm.xlu0 %586, %v581
        %v588 = vpop.permute.xlu0 %587
        %591 = vset.pattern.permute.xlu0 0
        %592 = vperm.xlu0 %591, %v582
        %v593 = vpop.permute.xlu0 %592
        %596 = vset.pattern.permute.xlu0 0
        %597 = vperm.xlu0 %596, %v583
        %v598 = vpop.permute.xlu0 %597
        %601 = vset.pattern.permute.xlu0 0
        %602 = vperm.xlu0 %601, %v584
        %v603 = vpop.permute.xlu0 %602
        %v605 = vmul.f32 %v577, %v588
        %v606 = vmul.f32 %v578, %v593
        %v607 = vmul.f32 %v579, %v598
        %v608 = vmul.f32 %v580, %v603
        %v609 = vadd.f32 %v605, %v561
        %v610 = vadd.f32 %v606, %v562
        %v611 = vadd.f32 %v607, %v563
        %v612 = vadd.f32 %v608, %v564
        %613 = vst.msk [vmem:[#allocation3] sm:$0xff] %vm265, %v609
        %614 = vst.msk [vmem:[#allocation3 + $0x8] sm:$0xff] %vm265, %v610
        %615 = vst.msk [vmem:[#allocation3 + $0x10] sm:$0xff] %vm265, %v611
        %616 = vst.msk [vmem:[#allocation3 + $0x18] sm:$0xff] %vm265, %v612
        %v617 = vld [vmem:[#allocation3] ss:$2 sm:$0xff]
        %s618 = scalar_lea.vmem [#allocation3], 16
        %v619 = vld [vmem:[%s618] ss:$2 sm:$0xff]
        %s620 = scalar_lea.vmem [#allocation3], 1
        %v621 = vld [vmem:[%s620] ss:$2 sm:$0xff]
        %s622 = scalar_lea.vmem [#allocation3], 17
        %v623 = vld [vmem:[%s622] ss:$2 sm:$0xff]
        %v624 = vmax.f32 %v617, %v621
        %v625 = vmax.f32 %v619, %v623
        %626 = vxpose.xlu0.b32.start [1/16] %v624, 128
        %627 = vxpose.xlu0.b32.cont [2/16] %v625, 128
        %628 = vxpose.xlu0.b32.cont [3/16] 0.0, 128
        %629 = vxpose.xlu0.b32.cont [4/16] 0.0, 128
        %630 = vxpose.xlu0.b32.cont [5/16] 0.0, 128
        %631 = vxpose.xlu0.b32.cont [6/16] 0.0, 128
        %632 = vxpose.xlu0.b32.cont [7/16] 0.0, 128
        %633 = vxpose.xlu0.b32.cont [8/16] 0.0, 128
        %634 = vxpose.xlu0.b32.cont [9/16] 0.0, 128
        %635 = vxpose.xlu0.b32.cont [10/16] 0.0, 128
        %636 = vxpose.xlu0.b32.cont [11/16] 0.0, 128
        %637 = vxpose.xlu0.b32.cont [12/16] 0.0, 128
        %638 = vxpose.xlu0.b32.cont [13/16] 0.0, 128
        %639 = vxpose.xlu0.b32.cont [14/16] 0.0, 128
        %640 = vxpose.xlu0.b32.cont [15/16] 0.0, 128
        %641 = vxpose.xlu0.b32.end [16/16] 0.0, 128
        %v642 = vpop.trf.xlu0
        %v643 = vpop.trf.xlu0
        %v644 = vpop.trf.xlu0
        %v645 = vpop.trf.xlu0
        %v646 = vpop.trf.xlu0
        %v647 = vpop.trf.xlu0
        %v648 = vpop.trf.xlu0
        %v649 = vpop.trf.xlu0
        %v650 = vpop.trf.xlu0
        %v651 = vpop.trf.xlu0
        %v652 = vpop.trf.xlu0
        %v653 = vpop.trf.xlu0
        %v654 = vpop.trf.xlu0
        %v655 = vpop.trf.xlu0
        %v656 = vpop.trf.xlu0
        %v657 = vpop.trf.xlu0
        %658 = vst.msk [vmem:[%s219] sm:$0xff] %vm364, %v642
        %659 = vst.msk [vmem:[%s219 + $0x8] sm:$0xff] %vm364, %v643
        %660 = vst.msk [vmem:[%s219 + $0x10] sm:$0xff] %vm364, %v644
        %661 = vst.msk [vmem:[%s219 + $0x18] sm:$0xff] %vm364, %v645
        %p662 = scmp.lt.s32.totalorder %s18, 1
        %s663 = scalar_select %p662, %s18, 1
        %s664 = smul.addr %s663, 4
        %s665 = smul.addr %s664, 8
        %s666 = scalar_lea.vmem %s4, %s665
        // Predicated region
        $region41: #{tpu_custom_call.1} parent=35 // pred_check
          %p667 = pneg %p125
        $region42: #{tpu_custom_call.1} parent=35 // pred_check_branch
          %669 = sbr.rel (%p667) target = $region44
        $region43: #{tpu_custom_call.1} parent=35 // pred_region
          _
        $region44: #{tpu_custom_call.1} parent=35 // pred_fallthru
          _
      $region36: #{tpu_custom_call.1} parent=5 // pred_fallthru
        _
      %p670 = scmp.le.s32.totalorder 2, %s13
      // Predicated region
      $region45: #{tpu_custom_call.1} parent=5 // pred_check
        %p671 = pneg %p670
      $region46: #{tpu_custom_call.1} parent=5 // pred_check_branch
        %673 = sbr.rel (%p671) target = $region48
      $region47: #{tpu_custom_call.1} parent=5 // pred_region
        %s674 = ssub.s32 %s13, 2
        // Predicated region
        $region49: #{tpu_custom_call.1} parent=47 // pred_check
          %p675 = pneg %p131
        $region50: #{tpu_custom_call.1} parent=47 // pred_check_branch
          %677 = sbr.rel (%p675) target = $region52
        $region51: #{tpu_custom_call.1} parent=47 // pred_region
          %p678 = scmp.lt.s32.totalorder %s19, 1
          %s679 = scalar_select %p678, %s19, 1
          %s680 = smul.addr %s679, 4
          %s681 = smul.addr %s680, 8
          %s682 = scalar_lea.vmem %s4, %s681
        $region52: #{tpu_custom_call.1} parent=47 // pred_fallthru
          _
      $region48: #{tpu_custom_call.1} parent=5 // pred_fallthru
        _
    $region6: #{tpu_custom_call.1} parent=1 // loop_footer
      %s17 = sadd.s32 1, %s13
    $region7: #{tpu_custom_call.1} parent=1 // loop_footer_branch
      %12 = sbr.rel target = $region3
    $region8: #{tpu_custom_call.1} parent=1 // loop_exit
      _
    %683 = vsyncpa [#allocation5], 1
    %s684 = scalar_lea.sflag [#allocation5], 1
    %685 = vsyncpa %s684, 1

</llo_original>
